<compile_context>
chip_gen: v6e
topology: v6e:2x2x1
jax: 0.10.0
libtpu: 0.0.40
codegen_flags: <defaults>
</compile_context>

<pallas_src>
import functools

import jax
import jax.numpy as jnp
from jax.experimental import pallas as pl
from jax.experimental.pallas import tpu as pltpu


def _epnet_kernel(x_ref, w1_ref, b1_ref, w2_ref, b2_ref, o_ref, *, out_const):
    # x_ref:  (TBF, FOLD*D)     w1_ref: (FOLD*D, FOLD*H)   b1_ref: (1, FOLD*H)
    # w2_ref: (FOLD*H, FOLD*E)  b2_ref: (1, FOLD*E)        o_ref:  (TBF, FOLD*E)
    x = x_ref[...].astype(jnp.float32)
    h = jnp.dot(x, w1_ref[...], preferred_element_type=jnp.float32) + b1_ref[...]
    h = jnp.maximum(h, 0.0)                                       # ReLU
    z = jnp.dot(h, w2_ref[...], preferred_element_type=jnp.float32) + b2_ref[...]
    # Single fused multiply: out_const == scale * embed_dim (compile-time).
    o_ref[...] = (out_const * jax.nn.sigmoid(z)).astype(o_ref.dtype)


def epnet_forward(x, w1, b1, w2, b2, *, embed_dim, scale=2.0, fold=8, tbf=128):
    """EPNet forward.

    x: [B, D]; w1: [D, H]; b1: [H]; w2: [H, E]; b2: [E] -> [B, E]
    Weights stored as [in_features, out_features] (PyTorch Linear weight.T).

    fold: logical rows packed per physical row (lane-dense I/O).
    tbf:  folded-row tile size (tbf * fold logical rows per grid step).
    """
    B, D = x.shape
    H = w1.shape[1]
    E = w2.shape[1]
    assert w2.shape[0] == H and b1.shape == (H,) and b2.shape == (E,)
    assert E == embed_dim

    # --- wrapper-level layout plumbing: fold rows so last dims are >=128 ---
    B_pad = ((B + fold - 1) // fold) * fold
    if B_pad != B:
        x = jnp.pad(x, ((0, B_pad - B), (0, 0)))      # zero pad (no NaN garbage)
    Bf = B_pad // fold
    xf = x.reshape(Bf, fold * D)                      # row-major view, free

    eye = jnp.eye(fold, dtype=w1.dtype)
    w1f = jnp.kron(eye, w1)                           # (fold*D, fold*H) block-diag
    w2f = jnp.kron(eye.astype(w2.dtype), w2)          # (fold*H, fold*E) block-diag
    b1f = jnp.tile(b1, fold).reshape(1, fold * H)
    b2f = jnp.tile(b2, fold).reshape(1, fold * E)

    tbf = min(tbf, Bf)                                # full extent when batch small
    grid = (pl.cdiv(Bf, tbf),)
    out_const = float(scale) * float(embed_dim)

    kernel = functools.partial(_epnet_kernel, out_const=out_const)

    out_f = pl.pallas_call(
        kernel,
        out_shape=jax.ShapeDtypeStruct((Bf, fold * E), x.dtype),
        grid_spec=pl.GridSpec(
            grid=grid,
            in_specs=[
                pl.BlockSpec((tbf, fold * D), lambda i: (i, 0)),       # x tile
                pl.BlockSpec((fold * D, fold * H), lambda i: (0, 0)),  # W1 (resident)
                pl.BlockSpec((1, fold * H), lambda i: (0, 0)),         # b1
                pl.BlockSpec((fold * H, fold * E), lambda i: (0, 0)),  # W2 (resident)
                pl.BlockSpec((1, fold * E), lambda i: (0, 0)),         # b2
            ],
            out_specs=pl.BlockSpec((tbf, fold * E), lambda i: (i, 0)),
        ),
        compiler_params=pltpu.CompilerParams(
            dimension_semantics=("parallel",),
        ),
    )(xf, w1f, b1f, w2f, b2f)

    out = out_f.reshape(B_pad, E)                     # unfold (free)
    if B_pad != B:
        out = out[:B]
    return out


def epnet_reference(x, w1, b1, w2, b2, *, embed_dim, scale=2.0):
    h = jnp.maximum(x @ w1 + b1, 0.0)
    g = jax.nn.sigmoid(h @ w2 + b2)
    return scale * g * float(embed_dim)


if __name__ == "__main__":
    # Small shapes consistent with the module's forward.
    domain_feature_dim = 16
    embed_dim = 32  # hidden_dim == output_dim == embed_dim

    key = jax.random.PRNGKey(0)
    kx, k1, kb1, k2, kb2, kx2 = jax.random.split(key, 6)

    # Deterministic synthetic parameters (not a checkpoint load).
    w1 = 0.1 * jax.random.normal(k1, (domain_feature_dim, embed_dim), dtype=jnp.float32)
    b1 = 0.1 * jax.random.normal(kb1, (embed_dim,), dtype=jnp.float32)
    w2 = 0.1 * jax.random.normal(k2, (embed_dim, embed_dim), dtype=jnp.float32)
    b2 = 0.1 * jax.random.normal(kb2, (embed_dim,), dtype=jnp.float32)

    # --- test 1: tiny batch (single folded tile) ---
    batch = 8
    x = jax.random.normal(kx, (batch, domain_feature_dim), dtype=jnp.float32)
    out = jax.block_until_ready(epnet_forward(x, w1, b1, w2, b2, embed_dim=embed_dim))
    ref = epnet_reference(x, w1, b1, w2, b2, embed_dim=embed_dim)
    assert out.shape == (batch, embed_dim)
    assert jnp.allclose(out, ref, atol=1e-4, rtol=1e-4), "mismatch vs reference (small)"

    # --- test 2: batch not a multiple of fold, multi-step grid (exercises
    #             padding, partial last block, and pipelined batch tiling) ---
    batch2 = 203
    x2 = jax.random.normal(kx2, (batch2, domain_feature_dim), dtype=jnp.float32)
    out2 = jax.block_until_ready(
        epnet_forward(x2, w1, b1, w2, b2, embed_dim=embed_dim, tbf=8)
    )
    ref2 = epnet_reference(x2, w1, b1, w2, b2, embed_dim=embed_dim)
    assert out2.shape == (batch2, embed_dim)
    assert jnp.allclose(out2, ref2, atol=1e-4, rtol=1e-4), "mismatch vs reference (tiled)"

    print("KERNEL_OK")
</pallas_src>

<mosaic_0001>
module attributes {stable_mosaic.version = 11 : i64} {
  func.func @_epnet_kernel(%arg0: i32, %arg1: memref<1x128xf32, #tpu.memory_space<vmem>>, %arg2: memref<128x256xf32, #tpu.memory_space<vmem>>, %arg3: memref<1x256xf32, #tpu.memory_space<vmem>>, %arg4: memref<256x256xf32, #tpu.memory_space<vmem>>, %arg5: memref<1x256xf32, #tpu.memory_space<vmem>>, %arg6: memref<1x256xf32, #tpu.memory_space<vmem>>) attributes {dimension_semantics = [#tpu.dimension_semantics<parallel>], iteration_bounds = array<i64: 1>, scalar_prefetch = 0 : i64, scratch_operands = 0 : i64, tpu.core_type = #tpu.core_type<tc>, window_params = [{transform_indices = @transform_0, window_bounds = array<i64: 1, 128>}, {pipeline_mode = #tpu.pipeline_mode<synchronous>, transform_indices = @transform_1, window_bounds = array<i64: 128, 256>}, {pipeline_mode = #tpu.pipeline_mode<synchronous>, transform_indices = @transform_2, window_bounds = array<i64: 1, 256>}, {pipeline_mode = #tpu.pipeline_mode<synchronous>, transform_indices = @transform_3, window_bounds = array<i64: 256, 256>}, {pipeline_mode = #tpu.pipeline_mode<synchronous>, transform_indices = @transform_4, window_bounds = array<i64: 1, 256>}, {transform_indices = @transform_5, window_bounds = array<i64: 1, 256>}]} {
    %c0 = arith.constant 0 : index
    %c0_0 = arith.constant 0 : index
    %0 = vector.load %arg1[%c0, %c0_0] : memref<1x128xf32, #tpu.memory_space<vmem>>, vector<1x128xf32>
    %c0_1 = arith.constant 0 : index
    %c0_2 = arith.constant 0 : index
    %1 = vector.load %arg2[%c0_1, %c0_2] : memref<128x256xf32, #tpu.memory_space<vmem>>, vector<128x256xf32>
    %cst = arith.constant dense<0.000000e+00> : vector<1x256xf32>
    %2 = tpu.matmul %0, %1, %cst {dimension_numbers = #tpu.dot_dimension_numbers<[1], [0], [0], [1], [0, 0, 1, 1], [], []>} : vector<1x128xf32>, vector<128x256xf32>, vector<1x256xf32> -> vector<1x256xf32>
    %c0_3 = arith.constant 0 : index
    %c0_4 = arith.constant 0 : index
    %3 = vector.load %arg3[%c0_3, %c0_4] : memref<1x256xf32, #tpu.memory_space<vmem>>, vector<1x256xf32>
    %4 = arith.addf %2, %3 : vector<1x256xf32>
    %cst_5 = arith.constant 0.000000e+00 : f32
    %5 = vector.broadcast %cst_5 : f32 to vector<1x256xf32>
    %6 = arith.maximumf %4, %5 : vector<1x256xf32>
    %c0_6 = arith.constant 0 : index
    %c0_7 = arith.constant 0 : index
    %7 = vector.load %arg4[%c0_6, %c0_7] : memref<256x256xf32, #tpu.memory_space<vmem>>, vector<256x256xf32>
    %cst_8 = arith.constant dense<0.000000e+00> : vector<1x256xf32>
    %8 = tpu.matmul %6, %7, %cst_8 {dimension_numbers = #tpu.dot_dimension_numbers<[1], [0], [0], [1], [0, 0, 1, 1], [], []>} : vector<1x256xf32>, vector<256x256xf32>, vector<1x256xf32> -> vector<1x256xf32>
    %c0_9 = arith.constant 0 : index
    %c0_10 = arith.constant 0 : index
    %9 = vector.load %arg5[%c0_9, %c0_10] : memref<1x256xf32, #tpu.memory_space<vmem>>, vector<1x256xf32>
    %10 = arith.addf %8, %9 : vector<1x256xf32>
    %11 = arith.negf %10 : vector<1x256xf32>
    %12 = math.exp %11 : vector<1x256xf32>
    %cst_11 = arith.constant 1.000000e+00 : f32
    %13 = vector.broadcast %cst_11 : f32 to vector<1x256xf32>
    %14 = arith.addf %13, %12 : vector<1x256xf32>
    %15 = arith.divf %13, %14 : vector<1x256xf32>
    %cst_12 = arith.constant 6.400000e+01 : f32
    %16 = vector.broadcast %cst_12 : f32 to vector<1x256xf32>
    %17 = arith.mulf %16, %15 : vector<1x256xf32>
    %c0_13 = arith.constant 0 : index
    %c0_14 = arith.constant 0 : index
    %18 = vector.load %arg6[%c0_13, %c0_14] : memref<1x256xf32, #tpu.memory_space<vmem>>, vector<1x256xf32>
    tpu.vector_store %arg6[%c0_13, %c0_14], %17 {strides = array<i32>} : memref<1x256xf32, #tpu.memory_space<vmem>>, vector<1x256xf32>,
    return
  }
  func.func @transform_0(%arg0: i32) -> (i32, i32) {
    %c0_i32 = arith.constant 0 : i32
    %c0_i32_0 = arith.constant 0 : i32
    return %arg0, %c0_i32 : i32, i32
  }
  func.func @transform_1(%arg0: i32) -> (i32, i32) {
    %c0_i32 = arith.constant 0 : i32
    %c0_i32_0 = arith.constant 0 : i32
    %c0_i32_1 = arith.constant 0 : i32
    return %c0_i32, %c0_i32_0 : i32, i32
  }
  func.func @transform_2(%arg0: i32) -> (i32, i32) {
    %c0_i32 = arith.constant 0 : i32
    %c0_i32_0 = arith.constant 0 : i32
    %c0_i32_1 = arith.constant 0 : i32
    return %c0_i32, %c0_i32_0 : i32, i32
  }
  func.func @transform_3(%arg0: i32) -> (i32, i32) {
    %c0_i32 = arith.constant 0 : i32
    %c0_i32_0 = arith.constant 0 : i32
    %c0_i32_1 = arith.constant 0 : i32
    return %c0_i32, %c0_i32_0 : i32, i32
  }
  func.func @transform_4(%arg0: i32) -> (i32, i32) {
    %c0_i32 = arith.constant 0 : i32
    %c0_i32_0 = arith.constant 0 : i32
    %c0_i32_1 = arith.constant 0 : i32
    return %c0_i32, %c0_i32_0 : i32, i32
  }
  func.func @transform_5(%arg0: i32) -> (i32, i32) {
    %c0_i32 = arith.constant 0 : i32
    %c0_i32_0 = arith.constant 0 : i32
    return %arg0, %c0_i32 : i32, i32
  }
}

</mosaic_0001>

<llo_original>
// kernel: tpu_custom_call.1
$region0: #{tpu_custom_call.1}
  #allocation0 [shape = 'u32[]', space=smem, size = 0x4, offset = 0x4, fixed_abs, tag = 'smem constant byte address 0x4 - core index']
  #allocation1 [shape = 'u32[144,128]{1,0:T(1,128)}', space=vmem, size = 0x12000, scoped, tag = 'internal scratch']
  %s0 = inlined_call_operand.hbm [shape: f32[1,128], index: 0, kind: input, shape index: {}]
  %s1 = inlined_call_operand.hbm [shape: f32[128,256], index: 1, kind: input, shape index: {}]
  %s2 = inlined_call_operand.vmem [shape: f32[1,256], index: 2, kind: input, shape index: {}]
  %s3 = inlined_call_operand.hbm [shape: f32[256,256], index: 3, kind: input, shape index: {}]
  %s4 = inlined_call_operand.vmem [shape: f32[1,256], index: 4, kind: input, shape index: {}]
  %s5 = inlined_call_operand.hbm [shape: f32[1,256], index: 5, kind: output, shape index: {}]
  %s6 = sld [smem:[#allocation0]]
  $region42: #{tpu_custom_call.1} parent=0
    _
  %s8 = ssub.s32 1, %s6
  %s9 = scalar_select 0, %s8, %s6
  $region1: #{tpu_custom_call.1} parent=0
    #allocation2 [shape = 'u8[512]{0}', space=vmem, size = 0x400, scoped, tag = 'input window, operand 0, single buffered']
    #allocation3 [shape = 's32[1]{0}', space=sflag, size = 0x4, scoped, tag = 'scoped memory for tpu_custom_call.1']
    #allocation4 [shape = 's32[1]{0}', space=sflag, size = 0x4, scoped, tag = 'scoped memory for tpu_custom_call.1']
    #allocation5 [shape = 'u8[131072]{0}', space=vmem, size = 0x20000, scoped, tag = 'input window, operand 1, single buffered']
    #allocation6 [shape = 's32[1]{0}', space=sflag, size = 0x4, scoped, tag = 'scoped memory for tpu_custom_call.1']
    #allocation7 [shape = 'u8[262144]{0}', space=vmem, size = 0x40000, scoped, tag = 'input window, operand 3, single buffered']
    #allocation8 [shape = 'u8[1024]{0}', space=vmem, size = 0x400, scoped, tag = 'output window, operand 0, single buffered']
    %10 = vsyncpa [#allocation3], 0
    %11 = vsyncpa [#allocation6], 0
    %12 = vsyncpa [#allocation4], 0
    // Predicated region
    $region2: #{tpu_custom_call.1} parent=1 // pred_check
      _
    $region3: #{tpu_custom_call.1} parent=1 // pred_check_branch
      %14 = sbr.rel (0) target = $region5
    $region4: #{tpu_custom_call.1} parent=1 // pred_region
      %s16 = ssub.s32 16, 16
      %17 = vsyncadd [#allocation3], %s16
      %s19 = sshll.u32 [#allocation2], 4
      %s20 = int_to_ptr.vmem [resolvable:$true] %s19
      %22 = dma.hbm_to_vmem [thread:$0]  %s0, 16, %s20, [#allocation3]
    $region5: #{tpu_custom_call.1} parent=1 // pred_fallthru
      _
    // Predicated region
    $region6: #{tpu_custom_call.1} parent=1 // pred_check
      _
    $region7: #{tpu_custom_call.1} parent=1 // pred_check_branch
      %24 = sbr.rel (0) target = $region9
    $region8: #{tpu_custom_call.1} parent=1 // pred_region
      %s26 = ssub.s32 4096, 4096
      %27 = vsyncadd [#allocation6], %s26
      %s28 = sshll.u32 [#allocation5], 4
      %s29 = int_to_ptr.vmem [resolvable:$true] %s28
      %34 = dma.hbm_to_vmem [thread:$0]  %s1, 4096, %s29, [#allocation6], 256, 256, 16
    $region9: #{tpu_custom_call.1} parent=1 // pred_fallthru
      _
    // Predicated region
    $region10: #{tpu_custom_call.1} parent=1 // pred_check
      _
    $region11: #{tpu_custom_call.1} parent=1 // pred_check_branch
      %36 = sbr.rel (0) target = $region13
    $region12: #{tpu_custom_call.1} parent=1 // pred_region
      _
    $region13: #{tpu_custom_call.1} parent=1 // pred_fallthru
      _
    // Predicated region
    $region14: #{tpu_custom_call.1} parent=1 // pred_check
      _
    $region15: #{tpu_custom_call.1} parent=1 // pred_check_branch
      %38 = sbr.rel (0) target = $region17
    $region16: #{tpu_custom_call.1} parent=1 // pred_region
      %s40 = ssub.s32 8192, 8192
      %41 = vsyncadd [#allocation6], %s40
      %s42 = sshll.u32 [#allocation7], 4
      %s43 = int_to_ptr.vmem [resolvable:$true] %s42
      %48 = dma.hbm_to_vmem [thread:$0]  %s3, 8192, %s43, [#allocation6], 256, 256, 16
    $region17: #{tpu_custom_call.1} parent=1 // pred_fallthru
      _
    // Predicated region
    $region18: #{tpu_custom_call.1} parent=1 // pred_check
      _
    $region19: #{tpu_custom_call.1} parent=1 // pred_check_branch
      %50 = sbr.rel (0) target = $region21
    $region20: #{tpu_custom_call.1} parent=1 // pred_region
      _
    $region21: #{tpu_custom_call.1} parent=1 // pred_fallthru
      _
    // Predicated region
    $region22: #{tpu_custom_call.1} parent=1 // pred_check
      _
    $region23: #{tpu_custom_call.1} parent=1 // pred_check_branch
      %52 = sbr.rel (0) target = $region25
    $region24: #{tpu_custom_call.1} parent=1 // pred_region
      %53 = dma.done [#allocation3], 16
    $region25: #{tpu_custom_call.1} parent=1 // pred_fallthru
      _
    // Predicated region
    $region26: #{tpu_custom_call.1} parent=1 // pred_check
      _
    $region27: #{tpu_custom_call.1} parent=1 // pred_check_branch
      %55 = sbr.rel (0) target = $region29
    $region28: #{tpu_custom_call.1} parent=1 // pred_region
      %56 = dma.done [#allocation6], 4096
    $region29: #{tpu_custom_call.1} parent=1 // pred_fallthru
      _
    // Predicated region
    $region30: #{tpu_custom_call.1} parent=1 // pred_check
      _
    $region31: #{tpu_custom_call.1} parent=1 // pred_check_branch
      %58 = sbr.rel (0) target = $region33
    $region32: #{tpu_custom_call.1} parent=1 // pred_region
      %59 = dma.done [#allocation6], 8192
    $region33: #{tpu_custom_call.1} parent=1 // pred_fallthru
      _
    %v60 = vld [vmem:[#allocation2] sm:$0x1]
    %v61 = vld [vmem:[#allocation5] sm:$0xff]
    %v62 = vld [vmem:[#allocation5 + $0x8] sm:$0xff]
    %v63 = vld [vmem:[#allocation5 + $0x10] sm:$0xff]
    %v64 = vld [vmem:[#allocation5 + $0x18] sm:$0xff]
    %v65 = vld [vmem:[#allocation5 + $0x20] sm:$0xff]
    %v66 = vld [vmem:[#allocation5 + $0x28] sm:$0xff]
    %v67 = vld [vmem:[#allocation5 + $0x30] sm:$0xff]
    %v68 = vld [vmem:[#allocation5 + $0x38] sm:$0xff]
    %v69 = vld [vmem:[#allocation5 + $0x40] sm:$0xff]
    %v70 = vld [vmem:[#allocation5 + $0x48] sm:$0xff]
    %v71 = vld [vmem:[#allocation5 + $0x50] sm:$0xff]
    %v72 = vld [vmem:[#allocation5 + $0x58] sm:$0xff]
    %v73 = vld [vmem:[#allocation5 + $0x60] sm:$0xff]
    %v74 = vld [vmem:[#allocation5 + $0x68] sm:$0xff]
    %v75 = vld [vmem:[#allocation5 + $0x70] sm:$0xff]
    %v76 = vld [vmem:[#allocation5 + $0x78] sm:$0xff]
    %v77 = vld [vmem:[#allocation5 + $0x80] sm:$0xff]
    %v78 = vld [vmem:[#allocation5 + $0x88] sm:$0xff]
    %v79 = vld [vmem:[#allocation5 + $0x90] sm:$0xff]
    %v80 = vld [vmem:[#allocation5 + $0x98] sm:$0xff]
    %v81 = vld [vmem:[#allocation5 + $0xa0] sm:$0xff]
    %v82 = vld [vmem:[#allocation5 + $0xa8] sm:$0xff]
    %v83 = vld [vmem:[#allocation5 + $0xb0] sm:$0xff]
    %v84 = vld [vmem:[#allocation5 + $0xb8] sm:$0xff]
    %v85 = vld [vmem:[#allocation5 + $0xc0] sm:$0xff]
    %v86 = vld [vmem:[#allocation5 + $0xc8] sm:$0xff]
    %v87 = vld [vmem:[#allocation5 + $0xd0] sm:$0xff]
    %v88 = vld [vmem:[#allocation5 + $0xd8] sm:$0xff]
    %v89 = vld [vmem:[#allocation5 + $0xe0] sm:$0xff]
    %v90 = vld [vmem:[#allocation5 + $0xe8] sm:$0xff]
    %v91 = vld [vmem:[#allocation5 + $0xf0] sm:$0xff]
    %v92 = vld [vmem:[#allocation5 + $0xf8] sm:$0xff]
    %v93 = vld [vmem:[%s2] sm:$0x3]
    %v95 = vlaneseq
    %v96 = vshrl.u32 %v95, 7
    %v97 = vsub.s32 0, %v96
    %v98 = vrot.slane %v93, %v97
    %v99 = vlaneseq
    %v100 = vshrl.u32 %v99, 7
    %v101 = vsub.s32 1, %v100
    %v102 = vrot.slane %v93, %v101
    %105 = vmatprep.subr.mxu0 %v92
    %106 = vmatpush1.msra.mxu0 %v91
    %107 = vmatprep.subr.mxu0 %v90
    %108 = vmatpush1.msra.mxu0 %v89
    %109 = vmatprep.subr.mxu0 %v88
    %110 = vmatpush1.msra.mxu0 %v87
    %111 = vmatprep.subr.mxu0 %v86
    %112 = vmatpush1.msra.mxu0 %v85
    %113 = vmatprep.subr.mxu0 %v84
    %114 = vmatpush1.msra.mxu0 %v83
    %115 = vmatprep.subr.mxu0 %v82
    %116 = vmatpush1.msra.mxu0 %v81
    %117 = vmatprep.subr.mxu0 %v80
    %118 = vmatpush1.msra.mxu0 %v79
    %119 = vmatprep.subr.mxu0 %v78
    %120 = vmatpush1.msra.mxu0 %v77
    %121 = vmatprep.subr.mxu0 %v76
    %122 = vmatpush1.msra.mxu0 %v75
    %123 = vmatprep.subr.mxu0 %v74
    %124 = vmatpush1.msra.mxu0 %v73
    %125 = vmatprep.subr.mxu0 %v72
    %126 = vmatpush1.msra.mxu0 %v71
    %127 = vmatprep.subr.mxu0 %v70
    %128 = vmatpush1.msra.mxu0 %v69
    %129 = vmatprep.subr.mxu0 %v68
    %130 = vmatpush1.msra.mxu0 %v67
    %131 = vmatprep.subr.mxu0 %v66
    %132 = vmatpush1.msra.mxu0 %v65
    %133 = vmatprep.subr.mxu0 %v64
    %134 = vmatpush1.msra.mxu0 %v63
    %135 = vmatprep.subr.mxu0 %v62
    %136 = vmatpush1.msra.mxu0 %v61
    %137 = vmatprep.subr.mxu0 0.0
    %138 = vmatpush2.msra.mxu0 0.0
    %139 = vmatprep.subr.mxu0 0.0
    %140 = vmatpush2.msra.mxu0 0.0
    %141 = vmatprep.subr.mxu0 0.0
    %142 = vmatpush2.msra.mxu0 0.0
    %143 = vmatprep.subr.mxu0 0.0
    %144 = vmatpush2.msra.mxu0 0.0
    %145 = vmatprep.subr.mxu0 0.0
    %146 = vmatpush2.msra.mxu0 0.0
    %147 = vmatprep.subr.mxu0 0.0
    %148 = vmatpush2.msra.mxu0 0.0
    %149 = vmatprep.subr.mxu0 0.0
    %150 = vmatpush2.msra.mxu0 0.0
    %151 = vmatprep.subr.mxu0 0.0
    %152 = vmatpush2.msra.mxu0 0.0
    %153 = vmatprep.subr.mxu0 0.0
    %154 = vmatpush2.msra.mxu0 0.0
    %155 = vmatprep.subr.mxu0 0.0
    %156 = vmatpush2.msra.mxu0 0.0
    %157 = vmatprep.subr.mxu0 0.0
    %158 = vmatpush2.msra.mxu0 0.0
    %159 = vmatprep.subr.mxu0 0.0
    %160 = vmatpush2.msra.mxu0 0.0
    %161 = vmatprep.subr.mxu0 0.0
    %162 = vmatpush2.msra.mxu0 0.0
    %163 = vmatprep.subr.mxu0 0.0
    %164 = vmatpush2.msra.mxu0 0.0
    %165 = vmatprep.subr.mxu0 0.0
    %166 = vmatpush2.msra.mxu0 0.0
    %167 = vmatprep.subr.mxu0 0.0
    %168 = vmatpush2.msra.mxu0 0.0
    %169 = vmatprep.mubr.f32.mxu0 0.0
    %170 = vmatmul.mubr.f32.gmra.mxu0 %v60
    %v171 = vpop.f32.mrf.mxu0
    %v172 = vadd.f32 %v98, %v171
    %v173 = vpop.f32.mrf.mxu0
    %v174 = vadd.f32 %v102, %v173
    %175 = vdwg.mxu0
    %v176 = vmax.f32 %v172, 0.0
    %v177 = vmax.f32 %v174, 0.0
    %v178 = vld [vmem:[#allocation7] sm:$0xff]
    %v179 = vld [vmem:[#allocation7 + $0x8] sm:$0xff]
    %v180 = vld [vmem:[#allocation7 + $0x10] sm:$0xff]
    %v181 = vld [vmem:[#allocation7 + $0x18] sm:$0xff]
    %v182 = vld [vmem:[#allocation7 + $0x20] sm:$0xff]
    %v183 = vld [vmem:[#allocation7 + $0x28] sm:$0xff]
    %v184 = vld [vmem:[#allocation7 + $0x30] sm:$0xff]
    %v185 = vld [vmem:[#allocation7 + $0x38] sm:$0xff]
    %v186 = vld [vmem:[#allocation7 + $0x40] sm:$0xff]
    %v187 = vld [vmem:[#allocation7 + $0x48] sm:$0xff]
    %v188 = vld [vmem:[#allocation7 + $0x50] sm:$0xff]
    %v189 = vld [vmem:[#allocation7 + $0x58] sm:$0xff]
    %v190 = vld [vmem:[#allocation7 + $0x60] sm:$0xff]
    %v191 = vld [vmem:[#allocation7 + $0x68] sm:$0xff]
    %v192 = vld [vmem:[#allocation7 + $0x70] sm:$0xff]
    %v193 = vld [vmem:[#allocation7 + $0x78] sm:$0xff]
    %v194 = vld [vmem:[#allocation7 + $0x80] sm:$0xff]
    %v195 = vld [vmem:[#allocation7 + $0x88] sm:$0xff]
    %v196 = vld [vmem:[#allocation7 + $0x90] sm:$0xff]
    %v197 = vld [vmem:[#allocation7 + $0x98] sm:$0xff]
    %v198 = vld [vmem:[#allocation7 + $0xa0] sm:$0xff]
    %v199 = vld [vmem:[#allocation7 + $0xa8] sm:$0xff]
    %v200 = vld [vmem:[#allocation7 + $0xb0] sm:$0xff]
    %v201 = vld [vmem:[#allocation7 + $0xb8] sm:$0xff]
    %v202 = vld [vmem:[#allocation7 + $0xc0] sm:$0xff]
    %v203 = vld [vmem:[#allocation7 + $0xc8] sm:$0xff]
    %v204 = vld [vmem:[#allocation7 + $0xd0] sm:$0xff]
    %v205 = vld [vmem:[#allocation7 + $0xd8] sm:$0xff]
    %v206 = vld [vmem:[#allocation7 + $0xe0] sm:$0xff]
    %v207 = vld [vmem:[#allocation7 + $0xe8] sm:$0xff]
    %v208 = vld [vmem:[#allocation7 + $0xf0] sm:$0xff]
    %v209 = vld [vmem:[#allocation7 + $0xf8] sm:$0xff]
    %v210 = vld [vmem:[#allocation7 + $0x100] sm:$0xff]
    %v211 = vld [vmem:[#allocation7 + $0x108] sm:$0xff]
    %v212 = vld [vmem:[#allocation7 + $0x110] sm:$0xff]
    %v213 = vld [vmem:[#allocation7 + $0x118] sm:$0xff]
    %v214 = vld [vmem:[#allocation7 + $0x120] sm:$0xff]
    %v215 = vld [vmem:[#allocation7 + $0x128] sm:$0xff]
    %v216 = vld [vmem:[#allocation7 + $0x130] sm:$0xff]
    %v217 = vld [vmem:[#allocation7 + $0x138] sm:$0xff]
    %v218 = vld [vmem:[#allocation7 + $0x140] sm:$0xff]
    %v219 = vld [vmem:[#allocation7 + $0x148] sm:$0xff]
    %v220 = vld [vmem:[#allocation7 + $0x150] sm:$0xff]
    %v221 = vld [vmem:[#allocation7 + $0x158] sm:$0xff]
    %v222 = vld [vmem:[#allocation7 + $0x160] sm:$0xff]
    %v223 = vld [vmem:[#allocation7 + $0x168] sm:$0xff]
    %v224 = vld [vmem:[#allocation7 + $0x170] sm:$0xff]
    %v225 = vld [vmem:[#allocation7 + $0x178] sm:$0xff]
    %v226 = vld [vmem:[#allocation7 + $0x180] sm:$0xff]
    %v227 = vld [vmem:[#allocation7 + $0x188] sm:$0xff]
    %v228 = vld [vmem:[#allocation7 + $0x190] sm:$0xff]
    %v229 = vld [vmem:[#allocation7 + $0x198] sm:$0xff]
    %v230 = vld [vmem:[#allocation7 + $0x1a0] sm:$0xff]
    %v231 = vld [vmem:[#allocation7 + $0x1a8] sm:$0xff]
    %v232 = vld [vmem:[#allocation7 + $0x1b0] sm:$0xff]
    %v233 = vld [vmem:[#allocation7 + $0x1b8] sm:$0xff]
    %v234 = vld [vmem:[#allocation7 + $0x1c0] sm:$0xff]
    %v235 = vld [vmem:[#allocation7 + $0x1c8] sm:$0xff]
    %v236 = vld [vmem:[#allocation7 + $0x1d0] sm:$0xff]
    %v237 = vld [vmem:[#allocation7 + $0x1d8] sm:$0xff]
    %v238 = vld [vmem:[#allocation7 + $0x1e0] sm:$0xff]
    %v239 = vld [vmem:[#allocation7 + $0x1e8] sm:$0xff]
    %v240 = vld [vmem:[#allocation7 + $0x1f0] sm:$0xff]
    %v241 = vld [vmem:[#allocation7 + $0x1f8] sm:$0xff]
    %v242 = vld [vmem:[%s4] sm:$0x3]
    %v244 = vlaneseq
    %v245 = vshrl.u32 %v244, 7
    %v246 = vsub.s32 0, %v245
    %v247 = vrot.slane %v242, %v246
    %v248 = vlaneseq
    %v249 = vshrl.u32 %v248, 7
    %v250 = vsub.s32 1, %v249
    %v251 = vrot.slane %v242, %v250
    %254 = vmatprep.subr.mxu0 %v209
    %255 = vmatpush1.msra.mxu0 %v208
    %256 = vmatprep.subr.mxu0 %v207
    %257 = vmatpush1.msra.mxu0 %v206
    %258 = vmatprep.subr.mxu0 %v205
    %259 = vmatpush1.msra.mxu0 %v204
    %260 = vmatprep.subr.mxu0 %v203
    %261 = vmatpush1.msra.mxu0 %v202
    %262 = vmatprep.subr.mxu0 %v201
    %263 = vmatpush1.msra.mxu0 %v200
    %264 = vmatprep.subr.mxu0 %v199
    %265 = vmatpush1.msra.mxu0 %v198
    %266 = vmatprep.subr.mxu0 %v197
    %267 = vmatpush1.msra.mxu0 %v196
    %268 = vmatprep.subr.mxu0 %v195
    %269 = vmatpush1.msra.mxu0 %v194
    %270 = vmatprep.subr.mxu0 %v193
    %271 = vmatpush1.msra.mxu0 %v192
    %272 = vmatprep.subr.mxu0 %v191
    %273 = vmatpush1.msra.mxu0 %v190
    %274 = vmatprep.subr.mxu0 %v189
    %275 = vmatpush1.msra.mxu0 %v188
    %276 = vmatprep.subr.mxu0 %v187
    %277 = vmatpush1.msra.mxu0 %v186
    %278 = vmatprep.subr.mxu0 %v185
    %279 = vmatpush1.msra.mxu0 %v184
    %280 = vmatprep.subr.mxu0 %v183
    %281 = vmatpush1.msra.mxu0 %v182
    %282 = vmatprep.subr.mxu0 %v181
    %283 = vmatpush1.msra.mxu0 %v180
    %284 = vmatprep.subr.mxu0 %v179
    %285 = vmatpush1.msra.mxu0 %v178
    %286 = vmatprep.subr.mxu0 %v241
    %287 = vmatpush2.msra.mxu0 %v240
    %288 = vmatprep.subr.mxu0 %v239
    %289 = vmatpush2.msra.mxu0 %v238
    %290 = vmatprep.subr.mxu0 %v237
    %291 = vmatpush2.msra.mxu0 %v236
    %292 = vmatprep.subr.mxu0 %v235
    %293 = vmatpush2.msra.mxu0 %v234
    %294 = vmatprep.subr.mxu0 %v233
    %295 = vmatpush2.msra.mxu0 %v232
    %296 = vmatprep.subr.mxu0 %v231
    %297 = vmatpush2.msra.mxu0 %v230
    %298 = vmatprep.subr.mxu0 %v229
    %299 = vmatpush2.msra.mxu0 %v228
    %300 = vmatprep.subr.mxu0 %v227
    %301 = vmatpush2.msra.mxu0 %v226
    %302 = vmatprep.subr.mxu0 %v225
    %303 = vmatpush2.msra.mxu0 %v224
    %304 = vmatprep.subr.mxu0 %v223
    %305 = vmatpush2.msra.mxu0 %v222
    %306 = vmatprep.subr.mxu0 %v221
    %307 = vmatpush2.msra.mxu0 %v220
    %308 = vmatprep.subr.mxu0 %v219
    %309 = vmatpush2.msra.mxu0 %v218
    %310 = vmatprep.subr.mxu0 %v217
    %311 = vmatpush2.msra.mxu0 %v216
    %312 = vmatprep.subr.mxu0 %v215
    %313 = vmatpush2.msra.mxu0 %v214
    %314 = vmatprep.subr.mxu0 %v213
    %315 = vmatpush2.msra.mxu0 %v212
    %316 = vmatprep.subr.mxu0 %v211
    %317 = vmatpush2.msra.mxu0 %v210
    %318 = vmatprep.mubr.f32.mxu0 %v177
    %319 = vmatmul.mubr.f32.gmra.mxu0 %v176
    %v320 = vpop.f32.mrf.mxu0
    %v321 = vadd.f32 %v247, %v320
    %v322 = vpop.f32.mrf.mxu0
    %v323 = vadd.f32 %v251, %v322
    %324 = vdwg.mxu0
    %v325 = vxor.u32 %v321, 2147483648
    %v326 = vxor.u32 %v323, 2147483648
    %v327 = vmul.f32 %v325, 1.442695
    %v328 = vpow.pop %v327
    %v329 = vmul.f32 %v326, 1.442695
    %v330 = vpow.pop %v329
    %v331 = vadd.f32 %v328, 1.0
    %v332 = vadd.f32 %v330, 1.0
    %v333 = vrcp.pop %v331
    %v334 = vmul.f32 1.0, %v333
    %v335 = vrcp.pop %v332
    %v336 = vmul.f32 1.0, %v335
    %v337 = vmul.f32 %v334, 64.0
    %v338 = vmul.f32 %v336, 64.0
    %v341 = vcombine.low %v337, %v338
    %v343 = vunpack.c.l.s4 1966171168
    %v344 = vunpack.c.0.s8 %v343
    %v345 = vlaneseq
    %v346 = vshrl.u32 %v345, 7
    %v347 = vsub.s32 %v344, %v346
    %v348 = vrot.slane %v341, %v347
    %v350 = vunpack.c.l.s4 1966171168
    %v351 = vunpack.c.0.s8 %v350
    %v352 = vlaneseq
    %v353 = vshrl.u32 %v352, 7
    %v354 = vsub.s32 %v351, %v353
    %v355 = vrot.slane %v348, %v354
    %v357 = vlaneseq
    %vm358 = vcmp.ge.s32.totalorder %v357, 0
    %vm359 = vcmp.lt.s32.totalorder %v357, 256
    %vm360 = vmand %vm358, %vm359
    %361 = vst.msk [vmem:[#allocation8] sm:$0x3] %vm360, %v355
    // Predicated region
    $region34: #{tpu_custom_call.1} parent=1 // pred_check
      _
    $region35: #{tpu_custom_call.1} parent=1 // pred_check_branch
      %363 = sbr.rel (0) target = $region37
    $region36: #{tpu_custom_call.1} parent=1 // pred_region
      %s365 = ssub.s32 32, 32
      %366 = vsyncadd [#allocation4], %s365
      %s368 = sshll.u32 [#allocation8], 4
      %s369 = int_to_ptr.vmem [resolvable:$true] %s368
      %371 = dma.vmem_to_hbm [thread:$0]  %s369, 32, %s5, [#allocation4]
    $region37: #{tpu_custom_call.1} parent=1 // pred_fallthru
      _
    // Predicated region
    $region38: #{tpu_custom_call.1} parent=1 // pred_check
      _
    $region39: #{tpu_custom_call.1} parent=1 // pred_check_branch
      %373 = sbr.rel (0) target = $region41
    $region40: #{tpu_custom_call.1} parent=1 // pred_region
      %374 = dma.done [#allocation4], 32
    $region41: #{tpu_custom_call.1} parent=1 // pred_fallthru
      _
    %375 = vsyncpa [#allocation3], 1
    %376 = vsyncpa [#allocation6], 1
    %377 = vsyncpa [#allocation4], 1

</llo_original>
